<compile_context>
chip_gen: v5e
topology: v5e:2x2
jax: 0.10.0
libtpu: 0.0.40
codegen_flags: <defaults>
</compile_context>

<pallas_src>
import functools

import jax
import jax.numpy as jnp
from jax.experimental import pallas as pl
from jax.experimental.pallas import tpu as pltpu


def _round_up(x, m):
    return (x + m - 1) // m * m


def mlp_kernel(x_ref,
               w1_ref, b1_ref,
               w2_ref, b2_ref,
               w3_ref, b3_ref,
               w4_ref, b4_ref,
               o_ref):
    # Layer 1: Linear(state_dim, 512) + ReLU   (bf16 operands, f32 accumulate on MXU)
    h = jnp.dot(x_ref[...], w1_ref[...], preferred_element_type=jnp.float32)
    h = jnp.maximum(h + b1_ref[...], 0.0).astype(jnp.bfloat16)
    # Layer 2: Linear(512, 256) + ReLU
    h = jnp.dot(h, w2_ref[...], preferred_element_type=jnp.float32)
    h = jnp.maximum(h + b2_ref[...], 0.0).astype(jnp.bfloat16)
    # Dropout(0.3) -> identity in eval mode.
    # Layer 3: Linear(256, 256) + ReLU
    h = jnp.dot(h, w3_ref[...], preferred_element_type=jnp.float32)
    h = jnp.maximum(h + b3_ref[...], 0.0).astype(jnp.bfloat16)
    # Layer 4: Linear(256, action_dim_padded)
    out = jnp.dot(h, w4_ref[...], preferred_element_type=jnp.float32) + b4_ref[...]
    o_ref[...] = out.astype(o_ref.dtype)


def prepare_params(params):
    """One-time conversion (do this at init, not per forward call):
    bf16 weights, f32 biases, final layer padded to a 128-lane multiple."""
    (w1, b1), (w2, b2), (w3, b3), (w4, b4) = params
    action_dim = w4.shape[1]
    a_pad = _round_up(action_dim, 128)
    if a_pad != action_dim:
        w4 = jnp.pad(w4, ((0, 0), (0, a_pad - action_dim)))
        b4 = jnp.pad(b4, ((0, 0), (0, a_pad - action_dim)))
    weights = tuple(w.astype(jnp.bfloat16) for w in (w1, w2, w3, w4))
    biases = tuple(b.astype(jnp.float32) for b in (b1, b2, b3, b4))
    return weights, biases


def _select_batch_tile(B, max_batch_tile):
    # Small batches: single grid step (no per-step overhead), rounded to 16 rows (bf16 packing).
    if B <= 64:
        return _round_up(B, 16)
    # Medium batches: force >=2 grid steps so ("parallel",) can shard across both v7x TCs.
    if B <= 2 * max_batch_tile:
        return _round_up(pl.cdiv(B, 2), 16)
    return max_batch_tile


@functools.partial(jax.jit, static_argnames=("action_dim", "max_batch_tile"))
def nn_forward(state, weights, biases, *, action_dim, max_batch_tile=512):
    """state: [B, state_dim] float32. weights/biases: output of prepare_params."""
    B, state_dim = state.shape
    w1, w2, w3, w4 = weights
    b1, b2, b3, b4 = biases
    a_pad = w4.shape[1]

    batch_tile = _select_batch_tile(B, max_batch_tile)
    grid = (pl.cdiv(B, batch_tile),)

    x = state.astype(jnp.bfloat16)

    def x_map(i):
        return (i, 0)

    def full_map(i):
        return (0, 0)

    # x block keeps the full (unpadded) state_dim in the lane axis: a block dim equal to the
    # full array dim is exempt from the 128 rule, and K<256 is one MXU pass anyway.
    in_specs = [pl.BlockSpec((batch_tile, state_dim), x_map)]
    for w, b in zip(weights, biases):
        in_specs.append(pl.BlockSpec(w.shape, full_map))   # constant block index -> fetched once
        in_specs.append(pl.BlockSpec(b.shape, full_map))

    out = pl.pallas_call(
        mlp_kernel,
        out_shape=jax.ShapeDtypeStruct((B, a_pad), jnp.float32),
        grid_spec=pltpu.PrefetchScalarGridSpec(
            num_scalar_prefetch=0,
            grid=grid,
            in_specs=in_specs,
            out_specs=pl.BlockSpec((batch_tile, a_pad), x_map),
        ),
        compiler_params=pltpu.CompilerParams(
            dimension_semantics=("parallel",),
        ),
    )(x, w1, b1, w2, b2, w3, b3, w4, b4)

    # Slice away output-lane padding (rows are already exactly B thanks to the cdiv grid).
    return out[:, :action_dim]


def init_params(key, state_dim, action_dim):
    """Deterministic init mimicking NN._init_weights: W ~ N(0, 0.01), b ~ U(-0.1, 0.1)."""
    dims = [(state_dim, 512), (512, 256), (256, 256), (256, action_dim)]
    params = []
    for (din, dout) in dims:
        key, kw, kb = jax.random.split(key, 3)
        w = 0.01 * jax.random.normal(kw, (din, dout), dtype=jnp.float32)
        b = jax.random.uniform(kb, (1, dout), dtype=jnp.float32, minval=-0.1, maxval=0.1)
        params.append((w, b))
    return params


def reference_forward(state, params):
    (w1, b1), (w2, b2), (w3, b3), (w4, b4) = params
    h = jnp.maximum(state @ w1 + b1, 0.0)
    h = jnp.maximum(h @ w2 + b2, 0.0)
    h = jnp.maximum(h @ w3 + b3, 0.0)
    return h @ w4 + b4


if __name__ == "__main__":
    key = jax.random.PRNGKey(0)
    batch, state_dim, action_dim = 16, 32, 8

    key, kx = jax.random.split(key)
    state = jax.random.normal(kx, (batch, state_dim), dtype=jnp.float32)
    params = init_params(key, state_dim, action_dim)

    # One-time parameter prep (hoisted out of the forward path).
    weights, biases = prepare_params(params)

    out = nn_forward(state, weights, biases, action_dim=action_dim)
    out = jax.block_until_ready(out)

    ref = reference_forward(state, params)
    assert out.shape == (batch, action_dim)
    # bf16 matmul operands -> slightly looser tolerance than pure-f32.
    assert jnp.allclose(out, ref, atol=2e-2, rtol=2e-2), "mismatch vs. pure-JAX reference"

    print("KERNEL_OK")
</pallas_src>

<mosaic_0001>
module attributes {stable_mosaic.version = 11 : i64} {
  func.func @mlp_kernel(%arg0: i32, %arg1: memref<16x32xbf16, #tpu.memory_space<vmem>>, %arg2: memref<32x512xbf16, #tpu.memory_space<vmem>>, %arg3: memref<1x512xf32, #tpu.memory_space<vmem>>, %arg4: memref<512x256xbf16, #tpu.memory_space<vmem>>, %arg5: memref<1x256xf32, #tpu.memory_space<vmem>>, %arg6: memref<256x256xbf16, #tpu.memory_space<vmem>>, %arg7: memref<1x256xf32, #tpu.memory_space<vmem>>, %arg8: memref<256x128xbf16, #tpu.memory_space<vmem>>, %arg9: memref<1x128xf32, #tpu.memory_space<vmem>>, %arg10: memref<16x128xf32, #tpu.memory_space<vmem>>) attributes {dimension_semantics = [#tpu.dimension_semantics<parallel>], iteration_bounds = array<i64: 1>, scalar_prefetch = 0 : i64, scratch_operands = 0 : i64, tpu.core_type = #tpu.core_type<tc>, window_params = [{transform_indices = @transform_0, window_bounds = array<i64: 16, 32>}, {pipeline_mode = #tpu.pipeline_mode<synchronous>, transform_indices = @transform_1, window_bounds = array<i64: 32, 512>}, {pipeline_mode = #tpu.pipeline_mode<synchronous>, transform_indices = @transform_2, window_bounds = array<i64: 1, 512>}, {pipeline_mode = #tpu.pipeline_mode<synchronous>, transform_indices = @transform_3, window_bounds = array<i64: 512, 256>}, {pipeline_mode = #tpu.pipeline_mode<synchronous>, transform_indices = @transform_4, window_bounds = array<i64: 1, 256>}, {pipeline_mode = #tpu.pipeline_mode<synchronous>, transform_indices = @transform_5, window_bounds = array<i64: 256, 256>}, {pipeline_mode = #tpu.pipeline_mode<synchronous>, transform_indices = @transform_6, window_bounds = array<i64: 1, 256>}, {pipeline_mode = #tpu.pipeline_mode<synchronous>, transform_indices = @transform_7, window_bounds = array<i64: 256, 128>}, {pipeline_mode = #tpu.pipeline_mode<synchronous>, transform_indices = @transform_8, window_bounds = array<i64: 1, 128>}, {transform_indices = @transform_9, window_bounds = array<i64: 16, 128>}]} {
    %c0 = arith.constant 0 : index
    %c0_0 = arith.constant 0 : index
    %0 = vector.load %arg1[%c0, %c0_0] : memref<16x32xbf16, #tpu.memory_space<vmem>>, vector<16x32xbf16>
    %c0_1 = arith.constant 0 : index
    %c0_2 = arith.constant 0 : index
    %1 = vector.load %arg2[%c0_1, %c0_2] : memref<32x512xbf16, #tpu.memory_space<vmem>>, vector<32x512xbf16>
    %cst = arith.constant dense<0.000000e+00> : vector<16x512xf32>
    %2 = tpu.matmul %0, %1, %cst {dimension_numbers = #tpu.dot_dimension_numbers<[1], [0], [0], [1], [0, 0, 1, 1], [], []>} : vector<16x32xbf16>, vector<32x512xbf16>, vector<16x512xf32> -> vector<16x512xf32>
    %c0_3 = arith.constant 0 : index
    %c0_4 = arith.constant 0 : index
    %3 = vector.load %arg3[%c0_3, %c0_4] : memref<1x512xf32, #tpu.memory_space<vmem>>, vector<1x512xf32>
    %4 = vector.broadcast %3 : vector<1x512xf32> to vector<16x512xf32>
    %5 = arith.addf %2, %4 : vector<16x512xf32>
    %cst_5 = arith.constant 0.000000e+00 : f32
    %6 = vector.broadcast %cst_5 : f32 to vector<16x512xf32>
    %7 = arith.maximumf %5, %6 : vector<16x512xf32>
    %8 = arith.truncf %7 : vector<16x512xf32> to vector<16x512xbf16>
    %c0_6 = arith.constant 0 : index
    %c0_7 = arith.constant 0 : index
    %9 = vector.load %arg4[%c0_6, %c0_7] : memref<512x256xbf16, #tpu.memory_space<vmem>>, vector<512x256xbf16>
    %cst_8 = arith.constant dense<0.000000e+00> : vector<16x256xf32>
    %10 = tpu.matmul %8, %9, %cst_8 {dimension_numbers = #tpu.dot_dimension_numbers<[1], [0], [0], [1], [0, 0, 1, 1], [], []>} : vector<16x512xbf16>, vector<512x256xbf16>, vector<16x256xf32> -> vector<16x256xf32>
    %c0_9 = arith.constant 0 : index
    %c0_10 = arith.constant 0 : index
    %11 = vector.load %arg5[%c0_9, %c0_10] : memref<1x256xf32, #tpu.memory_space<vmem>>, vector<1x256xf32>
    %12 = vector.broadcast %11 : vector<1x256xf32> to vector<16x256xf32>
    %13 = arith.addf %10, %12 : vector<16x256xf32>
    %cst_11 = arith.constant 0.000000e+00 : f32
    %14 = vector.broadcast %cst_11 : f32 to vector<16x256xf32>
    %15 = arith.maximumf %13, %14 : vector<16x256xf32>
    %16 = arith.truncf %15 : vector<16x256xf32> to vector<16x256xbf16>
    %c0_12 = arith.constant 0 : index
    %c0_13 = arith.constant 0 : index
    %17 = vector.load %arg6[%c0_12, %c0_13] : memref<256x256xbf16, #tpu.memory_space<vmem>>, vector<256x256xbf16>
    %cst_14 = arith.constant dense<0.000000e+00> : vector<16x256xf32>
    %18 = tpu.matmul %16, %17, %cst_14 {dimension_numbers = #tpu.dot_dimension_numbers<[1], [0], [0], [1], [0, 0, 1, 1], [], []>} : vector<16x256xbf16>, vector<256x256xbf16>, vector<16x256xf32> -> vector<16x256xf32>
    %c0_15 = arith.constant 0 : index
    %c0_16 = arith.constant 0 : index
    %19 = vector.load %arg7[%c0_15, %c0_16] : memref<1x256xf32, #tpu.memory_space<vmem>>, vector<1x256xf32>
    %20 = vector.broadcast %19 : vector<1x256xf32> to vector<16x256xf32>
    %21 = arith.addf %18, %20 : vector<16x256xf32>
    %cst_17 = arith.constant 0.000000e+00 : f32
    %22 = vector.broadcast %cst_17 : f32 to vector<16x256xf32>
    %23 = arith.maximumf %21, %22 : vector<16x256xf32>
    %24 = arith.truncf %23 : vector<16x256xf32> to vector<16x256xbf16>
    %c0_18 = arith.constant 0 : index
    %c0_19 = arith.constant 0 : index
    %25 = vector.load %arg8[%c0_18, %c0_19] : memref<256x128xbf16, #tpu.memory_space<vmem>>, vector<256x128xbf16>
    %cst_20 = arith.constant dense<0.000000e+00> : vector<16x128xf32>
    %26 = tpu.matmul %24, %25, %cst_20 {dimension_numbers = #tpu.dot_dimension_numbers<[1], [0], [0], [1], [0, 0, 1, 1], [], []>} : vector<16x256xbf16>, vector<256x128xbf16>, vector<16x128xf32> -> vector<16x128xf32>
    %c0_21 = arith.constant 0 : index
    %c0_22 = arith.constant 0 : index
    %27 = vector.load %arg9[%c0_21, %c0_22] : memref<1x128xf32, #tpu.memory_space<vmem>>, vector<1x128xf32>
    %28 = vector.broadcast %27 : vector<1x128xf32> to vector<16x128xf32>
    %29 = arith.addf %26, %28 : vector<16x128xf32>
    %c0_23 = arith.constant 0 : index
    %c0_24 = arith.constant 0 : index
    %30 = vector.load %arg10[%c0_23, %c0_24] : memref<16x128xf32, #tpu.memory_space<vmem>>, vector<16x128xf32>
    tpu.vector_store %arg10[%c0_23, %c0_24], %29 {strides = array<i32>} : memref<16x128xf32, #tpu.memory_space<vmem>>, vector<16x128xf32>,
    return
  }
  func.func @transform_0(%arg0: i32) -> (i32, i32) {
    %c0_i32 = arith.constant 0 : i32
    %c0_i32_0 = arith.constant 0 : i32
    return %arg0, %c0_i32 : i32, i32
  }
  func.func @transform_1(%arg0: i32) -> (i32, i32) {
    %c0_i32 = arith.constant 0 : i32
    %c0_i32_0 = arith.constant 0 : i32
    %c0_i32_1 = arith.constant 0 : i32
    return %c0_i32, %c0_i32_0 : i32, i32
  }
  func.func @transform_2(%arg0: i32) -> (i32, i32) {
    %c0_i32 = arith.constant 0 : i32
    %c0_i32_0 = arith.constant 0 : i32
    %c0_i32_1 = arith.constant 0 : i32
    return %c0_i32, %c0_i32_0 : i32, i32
  }
  func.func @transform_3(%arg0: i32) -> (i32, i32) {
    %c0_i32 = arith.constant 0 : i32
    %c0_i32_0 = arith.constant 0 : i32
    %c0_i32_1 = arith.constant 0 : i32
    return %c0_i32, %c0_i32_0 : i32, i32
  }
  func.func @transform_4(%arg0: i32) -> (i32, i32) {
    %c0_i32 = arith.constant 0 : i32
    %c0_i32_0 = arith.constant 0 : i32
    %c0_i32_1 = arith.constant 0 : i32
    return %c0_i32, %c0_i32_0 : i32, i32
  }
  func.func @transform_5(%arg0: i32) -> (i32, i32) {
    %c0_i32 = arith.constant 0 : i32
    %c0_i32_0 = arith.constant 0 : i32
    %c0_i32_1 = arith.constant 0 : i32
    return %c0_i32, %c0_i32_0 : i32, i32
  }
  func.func @transform_6(%arg0: i32) -> (i32, i32) {
    %c0_i32 = arith.constant 0 : i32
    %c0_i32_0 = arith.constant 0 : i32
    %c0_i32_1 = arith.constant 0 : i32
    return %c0_i32, %c0_i32_0 : i32, i32
  }
  func.func @transform_7(%arg0: i32) -> (i32, i32) {
    %c0_i32 = arith.constant 0 : i32
    %c0_i32_0 = arith.constant 0 : i32
    %c0_i32_1 = arith.constant 0 : i32
    return %c0_i32, %c0_i32_0 : i32, i32
  }
  func.func @transform_8(%arg0: i32) -> (i32, i32) {
    %c0_i32 = arith.constant 0 : i32
    %c0_i32_0 = arith.constant 0 : i32
    %c0_i32_1 = arith.constant 0 : i32
    return %c0_i32, %c0_i32_0 : i32, i32
  }
  func.func @transform_9(%arg0: i32) -> (i32, i32) {
    %c0_i32 = arith.constant 0 : i32
    %c0_i32_0 = arith.constant 0 : i32
    return %arg0, %c0_i32 : i32, i32
  }
}

</mosaic_0001>

<llo_original>
// kernel: nn_forward.1
$region0: #{nn_forward.1}
  #allocation0 [shape = 'u32[]', space=smem, size = 0x4, offset = 0x4, fixed_abs, tag = 'smem constant byte address 0x4 - core index']
  #allocation1 [shape = 'u32[72,128]{1,0:T(1,128)}', space=vmem, size = 0x9000, scoped, tag = 'internal scratch']
  %s0 = inlined_call_operand.vmem [shape: bf16[16,32], index: 0, kind: input, shape index: {}]
  %s1 = inlined_call_operand.hbm [shape: bf16[32,512], index: 1, kind: input, shape index: {}]
  %s2 = inlined_call_operand.vmem [shape: f32[1,512], index: 2, kind: input, shape index: {}]
  %s3 = inlined_call_operand.hbm [shape: bf16[512,256], index: 3, kind: input, shape index: {}]
  %s4 = inlined_call_operand.vmem [shape: f32[1,256], index: 4, kind: input, shape index: {}]
  %s5 = inlined_call_operand.hbm [shape: bf16[256,256], index: 5, kind: input, shape index: {}]
  %s6 = inlined_call_operand.vmem [shape: f32[1,256], index: 6, kind: input, shape index: {}]
  %s7 = inlined_call_operand.hbm [shape: bf16[256,128], index: 7, kind: input, shape index: {}]
  %s8 = inlined_call_operand.vmem [shape: f32[1,128], index: 8, kind: input, shape index: {}]
  %s9 = inlined_call_operand.vmem [shape: f32[16,128], index: 9, kind: output, shape index: {}]
  %s10 = sld [smem:[#allocation0]]
  $region62: #{nn_forward.1} parent=0
    _
  %s12 = ssub.s32 1, %s10
  %s13 = scalar_select 0, %s12, %s10
  $region1: #{nn_forward.1} parent=0
    #allocation2 [shape = 'u8[32768]{0}', space=vmem, size = 0x8000, scoped, tag = 'input window, operand 1, single buffered']
    #allocation3 [shape = 's32[1]{0}', space=sflag, size = 0x4, scoped, tag = 'scoped memory for nn_forward.1']
    #allocation4 [shape = 'u8[262144]{0}', space=vmem, size = 0x40000, scoped, tag = 'input window, operand 3, single buffered']
    #allocation5 [shape = 's32[1]{0}', space=sflag, size = 0x4, scoped, tag = 'scoped memory for nn_forward.1']
    #allocation6 [shape = 'u8[131072]{0}', space=vmem, size = 0x20000, scoped, tag = 'input window, operand 5, single buffered']
    #allocation7 [shape = 'u8[65536]{0}', space=vmem, size = 0x10000, scoped, tag = 'input window, operand 7, single buffered']
    #allocation8 [shape = 's32[1]{0}', space=sflag, size = 0x4, scoped, tag = 'scoped memory for nn_forward.1']
    %14 = vsyncpa [#allocation3], 0
    %15 = vsyncpa [#allocation5], 0
    %16 = vsyncpa [#allocation8], 0
    // Predicated region
    $region2: #{nn_forward.1} parent=1 // pred_check
      _
    $region3: #{nn_forward.1} parent=1 // pred_check_branch
      %18 = sbr.rel (0) target = $region5
    $region4: #{nn_forward.1} parent=1 // pred_region
      _
    $region5: #{nn_forward.1} parent=1 // pred_fallthru
      _
    // Predicated region
    $region6: #{nn_forward.1} parent=1 // pred_check
      _
    $region7: #{nn_forward.1} parent=1 // pred_check_branch
      %20 = sbr.rel (0) target = $region9
    $region8: #{nn_forward.1} parent=1 // pred_region
      %22 = vsyncadd [#allocation3], 0
      %s23 = sshll.u32 %s1, 4
      %s24 = int_to_ptr.hbm [resolvable:$true] %s23
      %s25 = sshll.u32 [#allocation2], 4
      %s26 = int_to_ptr.vmem [resolvable:$true] %s25
      %31 = dma.hbm_to_vmem [thread:$0]  %s24, 1024, %s26, [#allocation3], 256, 256, 16
    $region9: #{nn_forward.1} parent=1 // pred_fallthru
      _
    // Predicated region
    $region10: #{nn_forward.1} parent=1 // pred_check
      _
    $region11: #{nn_forward.1} parent=1 // pred_check_branch
      %33 = sbr.rel (0) target = $region13
    $region12: #{nn_forward.1} parent=1 // pred_region
      _
    $region13: #{nn_forward.1} parent=1 // pred_fallthru
      _
    // Predicated region
    $region14: #{nn_forward.1} parent=1 // pred_check
      _
    $region15: #{nn_forward.1} parent=1 // pred_check_branch
      %35 = sbr.rel (0) target = $region17
    $region16: #{nn_forward.1} parent=1 // pred_region
      %37 = vsyncadd [#allocation5], 0
      %s38 = sshll.u32 %s3, 4
      %s39 = int_to_ptr.hbm [resolvable:$true] %s38
      %s40 = sshll.u32 [#allocation4], 4
      %s41 = int_to_ptr.vmem [resolvable:$true] %s40
      %46 = dma.hbm_to_vmem [thread:$0]  %s39, 8192, %s41, [#allocation5], 128, 128, 8
    $region17: #{nn_forward.1} parent=1 // pred_fallthru
      _
    // Predicated region
    $region18: #{nn_forward.1} parent=1 // pred_check
      _
    $region19: #{nn_forward.1} parent=1 // pred_check_branch
      %48 = sbr.rel (0) target = $region21
    $region20: #{nn_forward.1} parent=1 // pred_region
      _
    $region21: #{nn_forward.1} parent=1 // pred_fallthru
      _
    // Predicated region
    $region22: #{nn_forward.1} parent=1 // pred_check
      _
    $region23: #{nn_forward.1} parent=1 // pred_check_branch
      %50 = sbr.rel (0) target = $region25
    $region24: #{nn_forward.1} parent=1 // pred_region
      %52 = vsyncadd [#allocation5], 0
      %s53 = sshll.u32 %s5, 4
      %s54 = int_to_ptr.hbm [resolvable:$true] %s53
      %s55 = sshll.u32 [#allocation6], 4
      %s56 = int_to_ptr.vmem [resolvable:$true] %s55
      %61 = dma.hbm_to_vmem [thread:$0]  %s54, 4096, %s56, [#allocation5], 128, 128, 8
    $region25: #{nn_forward.1} parent=1 // pred_fallthru
      _
    // Predicated region
    $region26: #{nn_forward.1} parent=1 // pred_check
      _
    $region27: #{nn_forward.1} parent=1 // pred_check_branch
      %63 = sbr.rel (0) target = $region29
    $region28: #{nn_forward.1} parent=1 // pred_region
      _
    $region29: #{nn_forward.1} parent=1 // pred_fallthru
      _
    // Predicated region
    $region30: #{nn_forward.1} parent=1 // pred_check
      _
    $region31: #{nn_forward.1} parent=1 // pred_check_branch
      %65 = sbr.rel (0) target = $region33
    $region32: #{nn_forward.1} parent=1 // pred_region
      %67 = vsyncadd [#allocation8], 0
      %s68 = sshll.u32 %s7, 4
      %s69 = int_to_ptr.hbm [resolvable:$true] %s68
      %s70 = sshll.u32 [#allocation7], 4
      %s71 = int_to_ptr.vmem [resolvable:$true] %s70
      %76 = dma.hbm_to_vmem [thread:$0]  %s69, 2048, %s71, [#allocation8], 64, 64, 4
    $region33: #{nn_forward.1} parent=1 // pred_fallthru
      _
    // Predicated region
    $region34: #{nn_forward.1} parent=1 // pred_check
      _
    $region35: #{nn_forward.1} parent=1 // pred_check_branch
      %78 = sbr.rel (0) target = $region37
    $region36: #{nn_forward.1} parent=1 // pred_region
      _
    $region37: #{nn_forward.1} parent=1 // pred_fallthru
      _
    // Predicated region
    $region38: #{nn_forward.1} parent=1 // pred_check
      _
    $region39: #{nn_forward.1} parent=1 // pred_check_branch
      %80 = sbr.rel (0) target = $region41
    $region40: #{nn_forward.1} parent=1 // pred_region
      %82 = dma.done [#allocation3], 1024
    $region41: #{nn_forward.1} parent=1 // pred_fallthru
      _
    // Predicated region
    $region42: #{nn_forward.1} parent=1 // pred_check
      _
    $region43: #{nn_forward.1} parent=1 // pred_check_branch
      %84 = sbr.rel (0) target = $region45
    $region44: #{nn_forward.1} parent=1 // pred_region
      %86 = dma.done [#allocation5], 8192
    $region45: #{nn_forward.1} parent=1 // pred_fallthru
      _
    // Predicated region
    $region46: #{nn_forward.1} parent=1 // pred_check
      _
    $region47: #{nn_forward.1} parent=1 // pred_check_branch
      %88 = sbr.rel (0) target = $region49
    $region48: #{nn_forward.1} parent=1 // pred_region
      %90 = dma.done [#allocation5], 4096
    $region49: #{nn_forward.1} parent=1 // pred_fallthru
      _
    // Predicated region
    $region50: #{nn_forward.1} parent=1 // pred_check
      _
    $region51: #{nn_forward.1} parent=1 // pred_check_branch
      %92 = sbr.rel (0) target = $region53
    $region52: #{nn_forward.1} parent=1 // pred_region
      %94 = dma.done [#allocation8], 2048
    $region53: #{nn_forward.1} parent=1 // pred_fallthru
      _
    %v96 = vld [vmem:[%s0] sm:$0xf]
    %v97 = vld [vmem:[%s0 + $0x4] sm:$0xf]
    %v98 = vld [vmem:[#allocation2] sm:$0xff]
    %v99 = vld [vmem:[#allocation2 + $0x8] sm:$0xff]
    %v100 = vld [vmem:[#allocation2 + $0x10] sm:$0xff]
    %v101 = vld [vmem:[#allocation2 + $0x18] sm:$0xff]
    %v102 = vld [vmem:[#allocation2 + $0x20] sm:$0xff]
    %v103 = vld [vmem:[#allocation2 + $0x28] sm:$0xff]
    %v104 = vld [vmem:[#allocation2 + $0x30] sm:$0xff]
    %v105 = vld [vmem:[#allocation2 + $0x38] sm:$0xff]
    %v106 = vld [vmem:[%s2] sm:$0xf]
    %v108 = vperm.slane %v106, 0
    %v109 = vperm.slane %v106, 1
    %v110 = vperm.slane %v106, 2
    %v111 = vperm.slane %v106, 3
    %v118 = vunpack.c.l.b16 %v96
    %v119 = vunpack.c.l.b16 %v97
    %v120 = vpack.c.b16 %v119, %v118
    %v129 = vunpack.c.l.b16 %v98
    %v130 = vunpack.c.h.b16 %v98
    %v131 = vunpack.c.l.b16 %v99
    %v132 = vunpack.c.h.b16 %v99
    %v133 = vunpack.c.l.b16 %v100
    %v134 = vunpack.c.h.b16 %v100
    %v135 = vunpack.c.l.b16 %v101
    %v136 = vunpack.c.h.b16 %v101
    %v137 = vunpack.c.l.b16 %v102
    %v138 = vunpack.c.h.b16 %v102
    %v139 = vunpack.c.l.b16 %v103
    %v140 = vunpack.c.h.b16 %v103
    %v141 = vunpack.c.l.b16 %v104
    %v142 = vunpack.c.h.b16 %v104
    %v143 = vunpack.c.l.b16 %v105
    %v144 = vunpack.c.h.b16 %v105
    %v145 = vpack.c.b16 %v133, %v129
    %v146 = vpack.c.b16 %v134, %v130
    %v147 = vpack.c.b16 %v135, %v131
    %v148 = vpack.c.b16 %v136, %v132
    %v149 = vpack.c.b16 %v141, %v137
    %v150 = vpack.c.b16 %v142, %v138
    %v151 = vpack.c.b16 %v143, %v139
    %v152 = vpack.c.b16 %v144, %v140
    %vm161 = vcmask 261120
    %v163 = vsel %vm161, %v120, 0
    %165 = vmatpush.bf16.msra.mxu0 0
    %166 = vmatpush.bf16.msra.mxu0 0
    %167 = vmatpush.bf16.msra.mxu0 0
    %168 = vmatpush.bf16.msra.mxu0 0
    %169 = vmatpush.bf16.msra.mxu0 0
    %170 = vmatpush.bf16.msra.mxu0 0
    %171 = vmatpush.bf16.msra.mxu0 %v149
    %172 = vmatpush.bf16.msra.mxu0 %v145
    %173 = vmatmul.bf16.gmra.mxu0 %v163
    %v174 = vpop.f32.mrf.mxu0
    %v175 = vadd.f32 %v108, %v174
    %v176 = vpop.f32.mrf.mxu0
    %v177 = vadd.f32 %v108, %v176
    %178 = vdwg.mxu0
    %179 = vmatpush.bf16.msra.mxu0 0
    %180 = vmatpush.bf16.msra.mxu0 0
    %181 = vmatpush.bf16.msra.mxu0 0
    %182 = vmatpush.bf16.msra.mxu0 0
    %183 = vmatpush.bf16.msra.mxu0 0
    %184 = vmatpush.bf16.msra.mxu0 0
    %185 = vmatpush.bf16.msra.mxu0 %v150
    %186 = vmatpush.bf16.msra.mxu0 %v146
    %187 = vmatmul.bf16.gmra.mxu0 %v163
    %v188 = vpop.f32.mrf.mxu0
    %v189 = vadd.f32 %v109, %v188
    %v190 = vpop.f32.mrf.mxu0
    %v191 = vadd.f32 %v109, %v190
    %192 = vdwg.mxu0
    %193 = vmatpush.bf16.msra.mxu0 0
    %194 = vmatpush.bf16.msra.mxu0 0
    %195 = vmatpush.bf16.msra.mxu0 0
    %196 = vmatpush.bf16.msra.mxu0 0
    %197 = vmatpush.bf16.msra.mxu0 0
    %198 = vmatpush.bf16.msra.mxu0 0
    %199 = vmatpush.bf16.msra.mxu0 %v151
    %200 = vmatpush.bf16.msra.mxu0 %v147
    %201 = vmatmul.bf16.gmra.mxu0 %v163
    %v202 = vpop.f32.mrf.mxu0
    %v203 = vadd.f32 %v110, %v202
    %v204 = vpop.f32.mrf.mxu0
    %v205 = vadd.f32 %v110, %v204
    %206 = vdwg.mxu0
    %207 = vmatpush.bf16.msra.mxu0 0
    %208 = vmatpush.bf16.msra.mxu0 0
    %209 = vmatpush.bf16.msra.mxu0 0
    %210 = vmatpush.bf16.msra.mxu0 0
    %211 = vmatpush.bf16.msra.mxu0 0
    %212 = vmatpush.bf16.msra.mxu0 0
    %213 = vmatpush.bf16.msra.mxu0 %v152
    %214 = vmatpush.bf16.msra.mxu0 %v148
    %215 = vmatmul.bf16.gmra.mxu0 %v163
    %v216 = vpop.f32.mrf.mxu0
    %v217 = vadd.f32 %v111, %v216
    %v218 = vpop.f32.mrf.mxu0
    %v219 = vadd.f32 %v111, %v218
    %220 = vdwg.mxu0
    %v221 = vmax.f32 %v175, 0.0
    %v222 = vmax.f32 %v189, 0.0
    %v223 = vmax.f32 %v203, 0.0
    %v224 = vmax.f32 %v217, 0.0
    %v225 = vmax.f32 %v177, 0.0
    %v226 = vmax.f32 %v191, 0.0
    %v227 = vmax.f32 %v205, 0.0
    %v228 = vmax.f32 %v219, 0.0
    %v229 = vpack.c.bf16 %v225, %v221
    %v230 = vpack.c.bf16 %v226, %v222
    %v231 = vpack.c.bf16 %v227, %v223
    %v232 = vpack.c.bf16 %v228, %v224
    %v233 = vld [vmem:[#allocation4] sm:$0xff]
    %v234 = vld [vmem:[#allocation4 + $0x8] sm:$0xff]
    %v235 = vld [vmem:[#allocation4 + $0x10] sm:$0xff]
    %v236 = vld [vmem:[#allocation4 + $0x18] sm:$0xff]
    %v237 = vld [vmem:[#allocation4 + $0x20] sm:$0xff]
    %v238 = vld [vmem:[#allocation4 + $0x28] sm:$0xff]
    %v239 = vld [vmem:[#allocation4 + $0x30] sm:$0xff]
    %v240 = vld [vmem:[#allocation4 + $0x38] sm:$0xff]
    %v241 = vld [vmem:[#allocation4 + $0x40] sm:$0xff]
    %v242 = vld [vmem:[#allocation4 + $0x48] sm:$0xff]
    %v243 = vld [vmem:[#allocation4 + $0x50] sm:$0xff]
    %v244 = vld [vmem:[#allocation4 + $0x58] sm:$0xff]
    %v245 = vld [vmem:[#allocation4 + $0x60] sm:$0xff]
    %v246 = vld [vmem:[#allocation4 + $0x68] sm:$0xff]
    %v247 = vld [vmem:[#allocation4 + $0x70] sm:$0xff]
    %v248 = vld [vmem:[#allocation4 + $0x78] sm:$0xff]
    %v249 = vld [vmem:[#allocation4 + $0x80] sm:$0xff]
    %v250 = vld [vmem:[#allocation4 + $0x88] sm:$0xff]
    %v251 = vld [vmem:[#allocation4 + $0x90] sm:$0xff]
    %v252 = vld [vmem:[#allocation4 + $0x98] sm:$0xff]
    %v253 = vld [vmem:[#allocation4 + $0xa0] sm:$0xff]
    %v254 = vld [vmem:[#allocation4 + $0xa8] sm:$0xff]
    %v255 = vld [vmem:[#allocation4 + $0xb0] sm:$0xff]
    %v256 = vld [vmem:[#allocation4 + $0xb8] sm:$0xff]
    %v257 = vld [vmem:[#allocation4 + $0xc0] sm:$0xff]
    %v258 = vld [vmem:[#allocation4 + $0xc8] sm:$0xff]
    %v259 = vld [vmem:[#allocation4 + $0xd0] sm:$0xff]
    %v260 = vld [vmem:[#allocation4 + $0xd8] sm:$0xff]
    %v261 = vld [vmem:[#allocation4 + $0xe0] sm:$0xff]
    %v262 = vld [vmem:[#allocation4 + $0xe8] sm:$0xff]
    %v263 = vld [vmem:[#allocation4 + $0xf0] sm:$0xff]
    %v264 = vld [vmem:[#allocation4 + $0xf8] sm:$0xff]
    %v265 = vld [vmem:[#allocation4 + $0x100] sm:$0xff]
    %v266 = vld [vmem:[#allocation4 + $0x108] sm:$0xff]
    %v267 = vld [vmem:[#allocation4 + $0x110] sm:$0xff]
    %v268 = vld [vmem:[#allocation4 + $0x118] sm:$0xff]
    %v269 = vld [vmem:[#allocation4 + $0x120] sm:$0xff]
    %v270 = vld [vmem:[#allocation4 + $0x128] sm:$0xff]
    %v271 = vld [vmem:[#allocation4 + $0x130] sm:$0xff]
    %v272 = vld [vmem:[#allocation4 + $0x138] sm:$0xff]
    %v273 = vld [vmem:[#allocation4 + $0x140] sm:$0xff]
    %v274 = vld [vmem:[#allocation4 + $0x148] sm:$0xff]
    %v275 = vld [vmem:[#allocation4 + $0x150] sm:$0xff]
    %v276 = vld [vmem:[#allocation4 + $0x158] sm:$0xff]
    %v277 = vld [vmem:[#allocation4 + $0x160] sm:$0xff]
    %v278 = vld [vmem:[#allocation4 + $0x168] sm:$0xff]
    %v279 = vld [vmem:[#allocation4 + $0x170] sm:$0xff]
    %v280 = vld [vmem:[#allocation4 + $0x178] sm:$0xff]
    %v281 = vld [vmem:[#allocation4 + $0x180] sm:$0xff]
    %v282 = vld [vmem:[#allocation4 + $0x188] sm:$0xff]
    %v283 = vld [vmem:[#allocation4 + $0x190] sm:$0xff]
    %v284 = vld [vmem:[#allocation4 + $0x198] sm:$0xff]
    %v285 = vld [vmem:[#allocation4 + $0x1a0] sm:$0xff]
    %v286 = vld [vmem:[#allocation4 + $0x1a8] sm:$0xff]
    %v287 = vld [vmem:[#allocation4 + $0x1b0] sm:$0xff]
    %v288 = vld [vmem:[#allocation4 + $0x1b8] sm:$0xff]
    %v289 = vld [vmem:[#allocation4 + $0x1c0] sm:$0xff]
    %v290 = vld [vmem:[#allocation4 + $0x1c8] sm:$0xff]
    %v291 = vld [vmem:[#allocation4 + $0x1d0] sm:$0xff]
    %v292 = vld [vmem:[#allocation4 + $0x1d8] sm:$0xff]
    %v293 = vld [vmem:[#allocation4 + $0x1e0] sm:$0xff]
    %v294 = vld [vmem:[#allocation4 + $0x1e8] sm:$0xff]
    %v295 = vld [vmem:[#allocation4 + $0x1f0] sm:$0xff]
    %v296 = vld [vmem:[#allocation4 + $0x1f8] sm:$0xff]
    %v297 = vld [vmem:[%s4] sm:$0x3]
    %v299 = vperm.slane %v297, 0
    %v300 = vperm.slane %v297, 1
    %v367 = vunpack.c.l.b16 %v233
    %v368 = vunpack.c.h.b16 %v233
    %v369 = vunpack.c.l.b16 %v234
    %v370 = vunpack.c.h.b16 %v234
    %v371 = vunpack.c.l.b16 %v235
    %v372 = vunpack.c.h.b16 %v235
    %v373 = vunpack.c.l.b16 %v236
    %v374 = vunpack.c.h.b16 %v236
    %v375 = vunpack.c.l.b16 %v237
    %v376 = vunpack.c.h.b16 %v237
    %v377 = vunpack.c.l.b16 %v238
    %v378 = vunpack.c.h.b16 %v238
    %v379 = vunpack.c.l.b16 %v239
    %v380 = vunpack.c.h.b16 %v239
    %v381 = vunpack.c.l.b16 %v240
    %v382 = vunpack.c.h.b16 %v240
    %v383 = vunpack.c.l.b16 %v241
    %v384 = vunpack.c.h.b16 %v241
    %v385 = vunpack.c.l.b16 %v242
    %v386 = vunpack.c.h.b16 %v242
    %v387 = vunpack.c.l.b16 %v243
    %v388 = vunpack.c.h.b16 %v243
    %v389 = vunpack.c.l.b16 %v244
    %v390 = vunpack.c.h.b16 %v244
    %v391 = vunpack.c.l.b16 %v245
    %v392 = vunpack.c.h.b16 %v245
    %v393 = vunpack.c.l.b16 %v246
    %v394 = vunpack.c.h.b16 %v246
    %v395 = vunpack.c.l.b16 %v247
    %v396 = vunpack.c.h.b16 %v247
    %v397 = vunpack.c.l.b16 %v248
    %v398 = vunpack.c.h.b16 %v248
    %v399 = vunpack.c.l.b16 %v249
    %v400 = vunpack.c.h.b16 %v249
    %v401 = vunpack.c.l.b16 %v250
    %v402 = vunpack.c.h.b16 %v250
    %v403 = vunpack.c.l.b16 %v251
    %v404 = vunpack.c.h.b16 %v251
    %v405 = vunpack.c.l.b16 %v252
    %v406 = vunpack.c.h.b16 %v252
    %v407 = vunpack.c.l.b16 %v253
    %v408 = vunpack.c.h.b16 %v253
    %v409 = vunpack.c.l.b16 %v254
    %v410 = vunpack.c.h.b16 %v254
    %v411 = vunpack.c.l.b16 %v255
    %v412 = vunpack.c.h.b16 %v255
    %v413 = vunpack.c.l.b16 %v256
    %v414 = vunpack.c.h.b16 %v256
    %v415 = vunpack.c.l.b16 %v257
    %v416 = vunpack.c.h.b16 %v257
    %v417 = vunpack.c.l.b16 %v258
    %v418 = vunpack.c.h.b16 %v258
    %v419 = vunpack.c.l.b16 %v259
    %v420 = vunpack.c.h.b16 %v259
    %v421 = vunpack.c.l.b16 %v260
    %v422 = vunpack.c.h.b16 %v260
    %v423 = vunpack.c.l.b16 %v261
    %v424 = vunpack.c.h.b16 %v261
    %v425 = vunpack.c.l.b16 %v262
    %v426 = vunpack.c.h.b16 %v262
    %v427 = vunpack.c.l.b16 %v263
    %v428 = vunpack.c.h.b16 %v263
    %v429 = vunpack.c.l.b16 %v264
    %v430 = vunpack.c.h.b16 %v264
    %v431 = vunpack.c.l.b16 %v265
    %v432 = vunpack.c.h.b16 %v265
    %v433 = vunpack.c.l.b16 %v266
    %v434 = vunpack.c.h.b16 %v266
    %v435 = vunpack.c.l.b16 %v267
    %v436 = vunpack.c.h.b16 %v267
    %v437 = vunpack.c.l.b16 %v268
    %v438 = vunpack.c.h.b16 %v268
    %v439 = vunpack.c.l.b16 %v269
    %v440 = vunpack.c.h.b16 %v269
    %v441 = vunpack.c.l.b16 %v270
    %v442 = vunpack.c.h.b16 %v270
    %v443 = vunpack.c.l.b16 %v271
    %v444 = vunpack.c.h.b16 %v271
    %v445 = vunpack.c.l.b16 %v272
    %v446 = vunpack.c.h.b16 %v272
    %v447 = vunpack.c.l.b16 %v273
    %v448 = vunpack.c.h.b16 %v273
    %v449 = vunpack.c.l.b16 %v274
    %v450 = vunpack.c.h.b16 %v274
    %v451 = vunpack.c.l.b16 %v275
    %v452 = vunpack.c.h.b16 %v275
    %v453 = vunpack.c.l.b16 %v276
    %v454 = vunpack.c.h.b16 %v276
    %v455 = vunpack.c.l.b16 %v277
    %v456 = vunpack.c.h.b16 %v277
    %v457 = vunpack.c.l.b16 %v278
    %v458 = vunpack.c.h.b16 %v278
    %v459 = vunpack.c.l.b16 %v279
    %v460 = vunpack.c.h.b16 %v279
    %v461 = vunpack.c.l.b16 %v280
    %v462 = vunpack.c.h.b16 %v280
    %v463 = vunpack.c.l.b16 %v281
    %v464 = vunpack.c.h.b16 %v281
    %v465 = vunpack.c.l.b16 %v282
    %v466 = vunpack.c.h.b16 %v282
    %v467 = vunpack.c.l.b16 %v283
    %v468 = vunpack.c.h.b16 %v283
    %v469 = vunpack.c.l.b16 %v284
    %v470 = vunpack.c.h.b16 %v284
    %v471 = vunpack.c.l.b16 %v285
    %v472 = vunpack.c.h.b16 %v285
    %v473 = vunpack.c.l.b16 %v286
    %v474 = vunpack.c.h.b16 %v286
    %v475 = vunpack.c.l.b16 %v287
    %v476 = vunpack.c.h.b16 %v287
    %v477 = vunpack.c.l.b16 %v288
    %v478 = vunpack.c.h.b16 %v288
    %v479 = vunpack.c.l.b16 %v289
    %v480 = vunpack.c.h.b16 %v289
    %v481 = vunpack.c.l.b16 %v290
    %v482 = vunpack.c.h.b16 %v290
    %v483 = vunpack.c.l.b16 %v291
    %v484 = vunpack.c.h.b16 %v291
    %v485 = vunpack.c.l.b16 %v292
    %v486 = vunpack.c.h.b16 %v292
    %v487 = vunpack.c.l.b16 %v293
    %v488 = vunpack.c.h.b16 %v293
    %v489 = vunpack.c.l.b16 %v294
    %v490 = vunpack.c.h.b16 %v294
    %v491 = vunpack.c.l.b16 %v295
    %v492 = vunpack.c.h.b16 %v295
    %v493 = vunpack.c.l.b16 %v296
    %v494 = vunpack.c.h.b16 %v296
    %v495 = vpack.c.b16 %v369, %v367
    %v496 = vpack.c.b16 %v370, %v368
    %v497 = vpack.c.b16 %v373, %v371
    %v498 = vpack.c.b16 %v374, %v372
    %v499 = vpack.c.b16 %v377, %v375
    %v500 = vpack.c.b16 %v378, %v376
    %v501 = vpack.c.b16 %v381, %v379
    %v502 = vpack.c.b16 %v382, %v380
    %v503 = vpack.c.b16 %v385, %v383
    %v504 = vpack.c.b16 %v386, %v384
    %v505 = vpack.c.b16 %v389, %v387
    %v506 = vpack.c.b16 %v390, %v388
    %v507 = vpack.c.b16 %v393, %v391
    %v508 = vpack.c.b16 %v394, %v392
    %v509 = vpack.c.b16 %v397, %v395
    %v510 = vpack.c.b16 %v398, %v396
    %v511 = vpack.c.b16 %v401, %v399
    %v512 = vpack.c.b16 %v402, %v400
    %v513 = vpack.c.b16 %v405, %v403
    %v514 = vpack.c.b16 %v406, %v404
    %v515 = vpack.c.b16 %v409, %v407
    %v516 = vpack.c.b16 %v410, %v408
    %v517 = vpack.c.b16 %v413, %v411
    %v518 = vpack.c.b16 %v414, %v412
    %v519 = vpack.c.b16 %v417, %v415
    %v520 = vpack.c.b16 %v418, %v416
    %v521 = vpack.c.b16 %v421, %v419
    %v522 = vpack.c.b16 %v422, %v420
    %v523 = vpack.c.b16 %v425, %v423
    %v524 = vpack.c.b16 %v426, %v424
    %v525 = vpack.c.b16 %v429, %v427
    %v526 = vpack.c.b16 %v430, %v428
    %v527 = vpack.c.b16 %v433, %v431
    %v528 = vpack.c.b16 %v434, %v432
    %v529 = vpack.c.b16 %v437, %v435
    %v530 = vpack.c.b16 %v438, %v436
    %v531 = vpack.c.b16 %v441, %v439
    %v532 = vpack.c.b16 %v442, %v440
    %v533 = vpack.c.b16 %v445, %v443
    %v534 = vpack.c.b16 %v446, %v444
    %v535 = vpack.c.b16 %v449, %v447
    %v536 = vpack.c.b16 %v450, %v448
    %v537 = vpack.c.b16 %v453, %v451
    %v538 = vpack.c.b16 %v454, %v452
    %v539 = vpack.c.b16 %v457, %v455
    %v540 = vpack.c.b16 %v458, %v456
    %v541 = vpack.c.b16 %v461, %v459
    %v542 = vpack.c.b16 %v462, %v460
    %v543 = vpack.c.b16 %v465, %v463
    %v544 = vpack.c.b16 %v466, %v464
    %v545 = vpack.c.b16 %v469, %v467
    %v546 = vpack.c.b16 %v470, %v468
    %v547 = vpack.c.b16 %v473, %v471
    %v548 = vpack.c.b16 %v474, %v472
    %v549 = vpack.c.b16 %v477, %v475
    %v550 = vpack.c.b16 %v478, %v476
    %v551 = vpack.c.b16 %v481, %v479
    %v552 = vpack.c.b16 %v482, %v480
    %v553 = vpack.c.b16 %v485, %v483
    %v554 = vpack.c.b16 %v486, %v484
    %v555 = vpack.c.b16 %v489, %v487
    %v556 = vpack.c.b16 %v490, %v488
    %v557 = vpack.c.b16 %v493, %v491
    %v558 = vpack.c.b16 %v494, %v492
    %623 = vmatpush.bf16.msra.mxu0 %v509
    %624 = vmatpush.bf16.msra.mxu0 %v507
    %625 = vmatpush.bf16.msra.mxu0 %v505
    %626 = vmatpush.bf16.msra.mxu0 %v503
    %627 = vmatpush.bf16.msra.mxu0 %v501
    %628 = vmatpush.bf16.msra.mxu0 %v499
    %629 = vmatpush.bf16.msra.mxu0 %v497
    %630 = vmatpush.bf16.msra.mxu0 %v495
    %631 = vmatmul.bf16.gmra.mxu0 %v229
    %v632 = vpop.f32.mrf.mxu0
    %v633 = vadd.f32 %v299, %v632
    %v634 = vpop.f32.mrf.mxu0
    %v635 = vadd.f32 %v299, %v634
    %636 = vdwg.mxu0
    %637 = vmatpush.bf16.msra.mxu0 %v525
    %638 = vmatpush.bf16.msra.mxu0 %v523
    %639 = vmatpush.bf16.msra.mxu0 %v521
    %640 = vmatpush.bf16.msra.mxu0 %v519
    %641 = vmatpush.bf16.msra.mxu0 %v517
    %642 = vmatpush.bf16.msra.mxu0 %v515
    %643 = vmatpush.bf16.msra.mxu0 %v513
    %644 = vmatpush.bf16.msra.mxu0 %v511
    %645 = vmatmul.bf16.gmra.mxu0 %v230
    %v646 = vpop.f32.mrf.mxu0
    %v647 = vadd.f32 %v633, %v646
    %v648 = vpop.f32.mrf.mxu0
    %v649 = vadd.f32 %v635, %v648
    %650 = vdwg.mxu0
    %651 = vmatpush.bf16.msra.mxu0 %v541
    %652 = vmatpush.bf16.msra.mxu0 %v539
    %653 = vmatpush.bf16.msra.mxu0 %v537
    %654 = vmatpush.bf16.msra.mxu0 %v535
    %655 = vmatpush.bf16.msra.mxu0 %v533
    %656 = vmatpush.bf16.msra.mxu0 %v531
    %657 = vmatpush.bf16.msra.mxu0 %v529
    %658 = vmatpush.bf16.msra.mxu0 %v527
    %659 = vmatmul.bf16.gmra.mxu0 %v231
    %v660 = vpop.f32.mrf.mxu0
    %v661 = vadd.f32 %v647, %v660
    %v662 = vpop.f32.mrf.mxu0
    %v663 = vadd.f32 %v649, %v662
    %664 = vdwg.mxu0
    %665 = vmatpush.bf16.msra.mxu0 %v557
    %666 = vmatpush.bf16.msra.mxu0 %v555
    %667 = vmatpush.bf16.msra.mxu0 %v553
    %668 = vmatpush.bf16.msra.mxu0 %v551
    %669 = vmatpush.bf16.msra.mxu0 %v549
    %670 = vmatpush.bf16.msra.mxu0 %v547
    %671 = vmatpush.bf16.msra.mxu0 %v545
    %672 = vmatpush.bf16.msra.mxu0 %v543
    %673 = vmatmul.bf16.gmra.mxu0 %v232
    %v674 = vpop.f32.mrf.mxu0
    %v675 = vadd.f32 %v661, %v674
    %v676 = vpop.f32.mrf.mxu0
    %v677 = vadd.f32 %v663, %v676
    %678 = vdwg.mxu0
    %679 = vmatpush.bf16.msra.mxu0 %v510
    %680 = vmatpush.bf16.msra.mxu0 %v508
    %681 = vmatpush.bf16.msra.mxu0 %v506
    %682 = vmatpush.bf16.msra.mxu0 %v504
    %683 = vmatpush.bf16.msra.mxu0 %v502
    %684 = vmatpush.bf16.msra.mxu0 %v500
    %685 = vmatpush.bf16.msra.mxu0 %v498
    %686 = vmatpush.bf16.msra.mxu0 %v496
    %687 = vmatmul.bf16.gmra.mxu0 %v229
    %v688 = vpop.f32.mrf.mxu0
    %v689 = vadd.f32 %v300, %v688
    %v690 = vpop.f32.mrf.mxu0
    %v691 = vadd.f32 %v300, %v690
    %692 = vdwg.mxu0
    %693 = vmatpush.bf16.msra.mxu0 %v526
    %694 = vmatpush.bf16.msra.mxu0 %v524
    %695 = vmatpush.bf16.msra.mxu0 %v522
    %696 = vmatpush.bf16.msra.mxu0 %v520
    %697 = vmatpush.bf16.msra.mxu0 %v518
    %698 = vmatpush.bf16.msra.mxu0 %v516
    %699 = vmatpush.bf16.msra.mxu0 %v514
    %700 = vmatpush.bf16.msra.mxu0 %v512
    %701 = vmatmul.bf16.gmra.mxu0 %v230
    %v702 = vpop.f32.mrf.mxu0
    %v703 = vadd.f32 %v689, %v702
    %v704 = vpop.f32.mrf.mxu0
    %v705 = vadd.f32 %v691, %v704
    %706 = vdwg.mxu0
    %707 = vmatpush.bf16.msra.mxu0 %v542
    %708 = vmatpush.bf16.msra.mxu0 %v540
    %709 = vmatpush.bf16.msra.mxu0 %v538
    %710 = vmatpush.bf16.msra.mxu0 %v536
    %711 = vmatpush.bf16.msra.mxu0 %v534
    %712 = vmatpush.bf16.msra.mxu0 %v532
    %713 = vmatpush.bf16.msra.mxu0 %v530
    %714 = vmatpush.bf16.msra.mxu0 %v528
    %715 = vmatmul.bf16.gmra.mxu0 %v231
    %v716 = vpop.f32.mrf.mxu0
    %v717 = vadd.f32 %v703, %v716
    %v718 = vpop.f32.mrf.mxu0
    %v719 = vadd.f32 %v705, %v718
    %720 = vdwg.mxu0
    %721 = vmatpush.bf16.msra.mxu0 %v558
    %722 = vmatpush.bf16.msra.mxu0 %v556
    %723 = vmatpush.bf16.msra.mxu0 %v554
    %724 = vmatpush.bf16.msra.mxu0 %v552
    %725 = vmatpush.bf16.msra.mxu0 %v550
    %726 = vmatpush.bf16.msra.mxu0 %v548
    %727 = vmatpush.bf16.msra.mxu0 %v546
    %728 = vmatpush.bf16.msra.mxu0 %v544
    %729 = vmatmul.bf16.gmra.mxu0 %v232
    %v730 = vpop.f32.mrf.mxu0
    %v731 = vadd.f32 %v717, %v730
    %v732 = vpop.f32.mrf.mxu0
    %v733 = vadd.f32 %v719, %v732
    %734 = vdwg.mxu0
    %v735 = vmax.f32 %v675, 0.0
    %v736 = vmax.f32 %v731, 0.0
    %v737 = vmax.f32 %v677, 0.0
    %v738 = vmax.f32 %v733, 0.0
    %v739 = vpack.c.bf16 %v737, %v735
    %v740 = vpack.c.bf16 %v738, %v736
    %v741 = vld [vmem:[#allocation6] sm:$0xff]
    %v742 = vld [vmem:[#allocation6 + $0x8] sm:$0xff]
    %v743 = vld [vmem:[#allocation6 + $0x10] sm:$0xff]
    %v744 = vld [vmem:[#allocation6 + $0x18] sm:$0xff]
    %v745 = vld [vmem:[#allocation6 + $0x20] sm:$0xff]
    %v746 = vld [vmem:[#allocation6 + $0x28] sm:$0xff]
    %v747 = vld [vmem:[#allocation6 + $0x30] sm:$0xff]
    %v748 = vld [vmem:[#allocation6 + $0x38] sm:$0xff]
    %v749 = vld [vmem:[#allocation6 + $0x40] sm:$0xff]
    %v750 = vld [vmem:[#allocation6 + $0x48] sm:$0xff]
    %v751 = vld [vmem:[#allocation6 + $0x50] sm:$0xff]
    %v752 = vld [vmem:[#allocation6 + $0x58] sm:$0xff]
    %v753 = vld [vmem:[#allocation6 + $0x60] sm:$0xff]
    %v754 = vld [vmem:[#allocation6 + $0x68] sm:$0xff]
    %v755 = vld [vmem:[#allocation6 + $0x70] sm:$0xff]
    %v756 = vld [vmem:[#allocation6 + $0x78] sm:$0xff]
    %v757 = vld [vmem:[#allocation6 + $0x80] sm:$0xff]
    %v758 = vld [vmem:[#allocation6 + $0x88] sm:$0xff]
    %v759 = vld [vmem:[#allocation6 + $0x90] sm:$0xff]
    %v760 = vld [vmem:[#allocation6 + $0x98] sm:$0xff]
    %v761 = vld [vmem:[#allocation6 + $0xa0] sm:$0xff]
    %v762 = vld [vmem:[#allocation6 + $0xa8] sm:$0xff]
    %v763 = vld [vmem:[#allocation6 + $0xb0] sm:$0xff]
    %v764 = vld [vmem:[#allocation6 + $0xb8] sm:$0xff]
    %v765 = vld [vmem:[#allocation6 + $0xc0] sm:$0xff]
    %v766 = vld [vmem:[#allocation6 + $0xc8] sm:$0xff]
    %v767 = vld [vmem:[#allocation6 + $0xd0] sm:$0xff]
    %v768 = vld [vmem:[#allocation6 + $0xd8] sm:$0xff]
    %v769 = vld [vmem:[#allocation6 + $0xe0] sm:$0xff]
    %v770 = vld [vmem:[#allocation6 + $0xe8] sm:$0xff]
    %v771 = vld [vmem:[#allocation6 + $0xf0] sm:$0xff]
    %v772 = vld [vmem:[#allocation6 + $0xf8] sm:$0xff]
    %v773 = vld [vmem:[%s6] sm:$0x3]
    %v775 = vperm.slane %v773, 0
    %v776 = vperm.slane %v773, 1
    %v811 = vunpack.c.l.b16 %v741
    %v812 = vunpack.c.h.b16 %v741
    %v813 = vunpack.c.l.b16 %v742
    %v814 = vunpack.c.h.b16 %v742
    %v815 = vunpack.c.l.b16 %v743
    %v816 = vunpack.c.h.b16 %v743
    %v817 = vunpack.c.l.b16 %v744
    %v818 = vunpack.c.h.b16 %v744
    %v819 = vunpack.c.l.b16 %v745
    %v820 = vunpack.c.h.b16 %v745
    %v821 = vunpack.c.l.b16 %v746
    %v822 = vunpack.c.h.b16 %v746
    %v823 = vunpack.c.l.b16 %v747
    %v824 = vunpack.c.h.b16 %v747
    %v825 = vunpack.c.l.b16 %v748
    %v826 = vunpack.c.h.b16 %v748
    %v827 = vunpack.c.l.b16 %v749
    %v828 = vunpack.c.h.b16 %v749
    %v829 = vunpack.c.l.b16 %v750
    %v830 = vunpack.c.h.b16 %v750
    %v831 = vunpack.c.l.b16 %v751
    %v832 = vunpack.c.h.b16 %v751
    %v833 = vunpack.c.l.b16 %v752
    %v834 = vunpack.c.h.b16 %v752
    %v835 = vunpack.c.l.b16 %v753
    %v836 = vunpack.c.h.b16 %v753
    %v837 = vunpack.c.l.b16 %v754
    %v838 = vunpack.c.h.b16 %v754
    %v839 = vunpack.c.l.b16 %v755
    %v840 = vunpack.c.h.b16 %v755
    %v841 = vunpack.c.l.b16 %v756
    %v842 = vunpack.c.h.b16 %v756
    %v843 = vunpack.c.l.b16 %v757
    %v844 = vunpack.c.h.b16 %v757
    %v845 = vunpack.c.l.b16 %v758
    %v846 = vunpack.c.h.b16 %v758
    %v847 = vunpack.c.l.b16 %v759
    %v848 = vunpack.c.h.b16 %v759
    %v849 = vunpack.c.l.b16 %v760
    %v850 = vunpack.c.h.b16 %v760
    %v851 = vunpack.c.l.b16 %v761
    %v852 = vunpack.c.h.b16 %v761
    %v853 = vunpack.c.l.b16 %v762
    %v854 = vunpack.c.h.b16 %v762
    %v855 = vunpack.c.l.b16 %v763
    %v856 = vunpack.c.h.b16 %v763
    %v857 = vunpack.c.l.b16 %v764
    %v858 = vunpack.c.h.b16 %v764
    %v859 = vunpack.c.l.b16 %v765
    %v860 = vunpack.c.h.b16 %v765
    %v861 = vunpack.c.l.b16 %v766
    %v862 = vunpack.c.h.b16 %v766
    %v863 = vunpack.c.l.b16 %v767
    %v864 = vunpack.c.h.b16 %v767
    %v865 = vunpack.c.l.b16 %v768
    %v866 = vunpack.c.h.b16 %v768
    %v867 = vunpack.c.l.b16 %v769
    %v868 = vunpack.c.h.b16 %v769
    %v869 = vunpack.c.l.b16 %v770
    %v870 = vunpack.c.h.b16 %v770
    %v871 = vunpack.c.l.b16 %v771
    %v872 = vunpack.c.h.b16 %v771
    %v873 = vunpack.c.l.b16 %v772
    %v874 = vunpack.c.h.b16 %v772
    %v875 = vpack.c.b16 %v813, %v811
    %v876 = vpack.c.b16 %v814, %v812
    %v877 = vpack.c.b16 %v817, %v815
    %v878 = vpack.c.b16 %v818, %v816
    %v879 = vpack.c.b16 %v821, %v819
    %v880 = vpack.c.b16 %v822, %v820
    %v881 = vpack.c.b16 %v825, %v823
    %v882 = vpack.c.b16 %v826, %v824
    %v883 = vpack.c.b16 %v829, %v827
    %v884 = vpack.c.b16 %v830, %v828
    %v885 = vpack.c.b16 %v833, %v831
    %v886 = vpack.c.b16 %v834, %v832
    %v887 = vpack.c.b16 %v837, %v835
    %v888 = vpack.c.b16 %v838, %v836
    %v889 = vpack.c.b16 %v841, %v839
    %v890 = vpack.c.b16 %v842, %v840
    %v891 = vpack.c.b16 %v845, %v843
    %v892 = vpack.c.b16 %v846, %v844
    %v893 = vpack.c.b16 %v849, %v847
    %v894 = vpack.c.b16 %v850, %v848
    %v895 = vpack.c.b16 %v853, %v851
    %v896 = vpack.c.b16 %v854, %v852
    %v897 = vpack.c.b16 %v857, %v855
    %v898 = vpack.c.b16 %v858, %v856
    %v899 = vpack.c.b16 %v861, %v859
    %v900 = vpack.c.b16 %v862, %v860
    %v901 = vpack.c.b16 %v865, %v863
    %v902 = vpack.c.b16 %v866, %v864
    %v903 = vpack.c.b16 %v869, %v867
    %v904 = vpack.c.b16 %v870, %v868
    %v905 = vpack.c.b16 %v873, %v871
    %v906 = vpack.c.b16 %v874, %v872
    %939 = vmatpush.bf16.msra.mxu0 %v889
    %940 = vmatpush.bf16.msra.mxu0 %v887
    %941 = vmatpush.bf16.msra.mxu0 %v885
    %942 = vmatpush.bf16.msra.mxu0 %v883
    %943 = vmatpush.bf16.msra.mxu0 %v881
    %944 = vmatpush.bf16.msra.mxu0 %v879
    %945 = vmatpush.bf16.msra.mxu0 %v877
    %946 = vmatpush.bf16.msra.mxu0 %v875
    %947 = vmatmul.bf16.gmra.mxu0 %v739
    %v948 = vpop.f32.mrf.mxu0
    %v949 = vadd.f32 %v775, %v948
    %v950 = vpop.f32.mrf.mxu0
    %v951 = vadd.f32 %v775, %v950
    %952 = vdwg.mxu0
    %953 = vmatpush.bf16.msra.mxu0 %v905
    %954 = vmatpush.bf16.msra.mxu0 %v903
    %955 = vmatpush.bf16.msra.mxu0 %v901
    %956 = vmatpush.bf16.msra.mxu0 %v899
    %957 = vmatpush.bf16.msra.mxu0 %v897
    %958 = vmatpush.bf16.msra.mxu0 %v895
    %959 = vmatpush.bf16.msra.mxu0 %v893
    %960 = vmatpush.bf16.msra.mxu0 %v891
    %961 = vmatmul.bf16.gmra.mxu0 %v740
    %v962 = vpop.f32.mrf.mxu0
    %v963 = vadd.f32 %v949, %v962
    %v964 = vpop.f32.mrf.mxu0
    %v965 = vadd.f32 %v951, %v964
    %966 = vdwg.mxu0
    %967 = vmatpush.bf16.msra.mxu0 %v890
    %968 = vmatpush.bf16.msra.mxu0 %v888
    %969 = vmatpush.bf16.msra.mxu0 %v886
    %970 = vmatpush.bf16.msra.mxu0 %v884
    %971 = vmatpush.bf16.msra.mxu0 %v882
    %972 = vmatpush.bf16.msra.mxu0 %v880
    %973 = vmatpush.bf16.msra.mxu0 %v878
    %974 = vmatpush.bf16.msra.mxu0 %v876
    %975 = vmatmul.bf16.gmra.mxu0 %v739
    %v976 = vpop.f32.mrf.mxu0
    %v977 = vadd.f32 %v776, %v976
    %v978 = vpop.f32.mrf.mxu0
    %v979 = vadd.f32 %v776, %v978
    %980 = vdwg.mxu0
    %981 = vmatpush.bf16.msra.mxu0 %v906
    %982 = vmatpush.bf16.msra.mxu0 %v904
    %983 = vmatpush.bf16.msra.mxu0 %v902
    %984 = vmatpush.bf16.msra.mxu0 %v900
    %985 = vmatpush.bf16.msra.mxu0 %v898
    %986 = vmatpush.bf16.msra.mxu0 %v896
    %987 = vmatpush.bf16.msra.mxu0 %v894
    %988 = vmatpush.bf16.msra.mxu0 %v892
    %989 = vmatmul.bf16.gmra.mxu0 %v740
    %v990 = vpop.f32.mrf.mxu0
    %v991 = vadd.f32 %v977, %v990
    %v992 = vpop.f32.mrf.mxu0
    %v993 = vadd.f32 %v979, %v992
    %994 = vdwg.mxu0
    %v995 = vmax.f32 %v963, 0.0
    %v996 = vmax.f32 %v991, 0.0
    %v997 = vmax.f32 %v965, 0.0
    %v998 = vmax.f32 %v993, 0.0
    %v999 = vpack.c.bf16 %v997, %v995
    %v1000 = vpack.c.bf16 %v998, %v996
    %v1001 = vld [vmem:[#allocation7] sm:$0xf]
    %v1002 = vld [vmem:[#allocation7 + $0x4] sm:$0xf]
    %v1003 = vld [vmem:[#allocation7 + $0x8] sm:$0xf]
    %v1004 = vld [vmem:[#allocation7 + $0xc] sm:$0xf]
    %v1005 = vld [vmem:[#allocation7 + $0x10] sm:$0xf]
    %v1006 = vld [vmem:[#allocation7 + $0x14] sm:$0xf]
    %v1007 = vld [vmem:[#allocation7 + $0x18] sm:$0xf]
    %v1008 = vld [vmem:[#allocation7 + $0x1c] sm:$0xf]
    %v1009 = vld [vmem:[#allocation7 + $0x20] sm:$0xf]
    %v1010 = vld [vmem:[#allocation7 + $0x24] sm:$0xf]
    %v1011 = vld [vmem:[#allocation7 + $0x28] sm:$0xf]
    %v1012 = vld [vmem:[#allocation7 + $0x2c] sm:$0xf]
    %v1013 = vld [vmem:[#allocation7 + $0x30] sm:$0xf]
    %v1014 = vld [vmem:[#allocation7 + $0x34] sm:$0xf]
    %v1015 = vld [vmem:[#allocation7 + $0x38] sm:$0xf]
    %v1016 = vld [vmem:[#allocation7 + $0x3c] sm:$0xf]
    %v1017 = vld [vmem:[#allocation7 + $0x40] sm:$0xf]
    %v1018 = vld [vmem:[#allocation7 + $0x44] sm:$0xf]
    %v1019 = vld [vmem:[#allocation7 + $0x48] sm:$0xf]
    %v1020 = vld [vmem:[#allocation7 + $0x4c] sm:$0xf]
    %v1021 = vld [vmem:[#allocation7 + $0x50] sm:$0xf]
    %v1022 = vld [vmem:[#allocation7 + $0x54] sm:$0xf]
    %v1023 = vld [vmem:[#allocation7 + $0x58] sm:$0xf]
    %v1024 = vld [vmem:[#allocation7 + $0x5c] sm:$0xf]
    %v1025 = vld [vmem:[#allocation7 + $0x60] sm:$0xf]
    %v1026 = vld [vmem:[#allocation7 + $0x64] sm:$0xf]
    %v1027 = vld [vmem:[#allocation7 + $0x68] sm:$0xf]
    %v1028 = vld [vmem:[#allocation7 + $0x6c] sm:$0xf]
    %v1029 = vld [vmem:[#allocation7 + $0x70] sm:$0xf]
    %v1030 = vld [vmem:[#allocation7 + $0x74] sm:$0xf]
    %v1031 = vld [vmem:[#allocation7 + $0x78] sm:$0xf]
    %v1032 = vld [vmem:[#allocation7 + $0x7c] sm:$0xf]
    %v1033 = vld [vmem:[%s8] sm:$0x1]
    %v1035 = vperm.slane %v1033, 0
    %v1069 = vunpack.c.l.b16 %v1001
    %v1070 = vunpack.c.l.b16 %v1002
    %v1071 = vunpack.c.l.b16 %v1003
    %v1072 = vunpack.c.l.b16 %v1004
    %v1073 = vunpack.c.l.b16 %v1005
    %v1074 = vunpack.c.l.b16 %v1006
    %v1075 = vunpack.c.l.b16 %v1007
    %v1076 = vunpack.c.l.b16 %v1008
    %v1077 = vunpack.c.l.b16 %v1009
    %v1078 = vunpack.c.l.b16 %v1010
    %v1079 = vunpack.c.l.b16 %v1011
    %v1080 = vunpack.c.l.b16 %v1012
    %v1081 = vunpack.c.l.b16 %v1013
    %v1082 = vunpack.c.l.b16 %v1014
    %v1083 = vunpack.c.l.b16 %v1015
    %v1084 = vunpack.c.l.b16 %v1016
    %v1085 = vunpack.c.l.b16 %v1017
    %v1086 = vunpack.c.l.b16 %v1018
    %v1087 = vunpack.c.l.b16 %v1019
    %v1088 = vunpack.c.l.b16 %v1020
    %v1089 = vunpack.c.l.b16 %v1021
    %v1090 = vunpack.c.l.b16 %v1022
    %v1091 = vunpack.c.l.b16 %v1023
    %v1092 = vunpack.c.l.b16 %v1024
    %v1093 = vunpack.c.l.b16 %v1025
    %v1094 = vunpack.c.l.b16 %v1026
    %v1095 = vunpack.c.l.b16 %v1027
    %v1096 = vunpack.c.l.b16 %v1028
    %v1097 = vunpack.c.l.b16 %v1029
    %v1098 = vunpack.c.l.b16 %v1030
    %v1099 = vunpack.c.l.b16 %v1031
    %v1100 = vunpack.c.l.b16 %v1032
    %v1101 = vpack.c.b16 %v1070, %v1069
    %v1102 = vpack.c.b16 %v1072, %v1071
    %v1103 = vpack.c.b16 %v1074, %v1073
    %v1104 = vpack.c.b16 %v1076, %v1075
    %v1105 = vpack.c.b16 %v1078, %v1077
    %v1106 = vpack.c.b16 %v1080, %v1079
    %v1107 = vpack.c.b16 %v1082, %v1081
    %v1108 = vpack.c.b16 %v1084, %v1083
    %v1109 = vpack.c.b16 %v1086, %v1085
    %v1110 = vpack.c.b16 %v1088, %v1087
    %v1111 = vpack.c.b16 %v1090, %v1089
    %v1112 = vpack.c.b16 %v1092, %v1091
    %v1113 = vpack.c.b16 %v1094, %v1093
    %v1114 = vpack.c.b16 %v1096, %v1095
    %v1115 = vpack.c.b16 %v1098, %v1097
    %v1116 = vpack.c.b16 %v1100, %v1099
    %1133 = vmatpush.bf16.msra.mxu0 %v1108
    %1134 = vmatpush.bf16.msra.mxu0 %v1107
    %1135 = vmatpush.bf16.msra.mxu0 %v1106
    %1136 = vmatpush.bf16.msra.mxu0 %v1105
    %1137 = vmatpush.bf16.msra.mxu0 %v1104
    %1138 = vmatpush.bf16.msra.mxu0 %v1103
    %1139 = vmatpush.bf16.msra.mxu0 %v1102
    %1140 = vmatpush.bf16.msra.mxu0 %v1101
    %1141 = vmatmul.bf16.gmra.mxu0 %v999
    %v1142 = vpop.f32.mrf.mxu0
    %v1143 = vadd.f32 %v1035, %v1142
    %v1144 = vpop.f32.mrf.mxu0
    %v1145 = vadd.f32 %v1035, %v1144
    %1146 = vdwg.mxu0
    %1147 = vmatpush.bf16.msra.mxu0 %v1116
    %1148 = vmatpush.bf16.msra.mxu0 %v1115
    %1149 = vmatpush.bf16.msra.mxu0 %v1114
    %1150 = vmatpush.bf16.msra.mxu0 %v1113
    %1151 = vmatpush.bf16.msra.mxu0 %v1112
    %1152 = vmatpush.bf16.msra.mxu0 %v1111
    %1153 = vmatpush.bf16.msra.mxu0 %v1110
    %1154 = vmatpush.bf16.msra.mxu0 %v1109
    %1155 = vmatmul.bf16.gmra.mxu0 %v1000
    %v1156 = vpop.f32.mrf.mxu0
    %v1157 = vadd.f32 %v1143, %v1156
    %v1158 = vpop.f32.mrf.mxu0
    %v1159 = vadd.f32 %v1145, %v1158
    %1160 = vdwg.mxu0
    %1161 = vst [vmem:[%s9] sm:$0xff] %v1157
    %1162 = vst [vmem:[%s9 + $0x8] sm:$0xff] %v1159
    // Predicated region
    $region54: #{nn_forward.1} parent=1 // pred_check
      _
    $region55: #{nn_forward.1} parent=1 // pred_check_branch
      %1164 = sbr.rel (0) target = $region57
    $region56: #{nn_forward.1} parent=1 // pred_region
      _
    $region57: #{nn_forward.1} parent=1 // pred_fallthru
      _
    // Predicated region
    $region58: #{nn_forward.1} parent=1 // pred_check
      _
    $region59: #{nn_forward.1} parent=1 // pred_check_branch
      %1166 = sbr.rel (0) target = $region61
    $region60: #{nn_forward.1} parent=1 // pred_region
      _
    $region61: #{nn_forward.1} parent=1 // pred_fallthru
      _
    %1167 = vsyncpa [#allocation3], 1
    %1168 = vsyncpa [#allocation5], 1
    %1169 = vsyncpa [#allocation8], 1

</llo_original>
